<compile_context>
chip_gen: v5e
topology: v5e:2x2
jax: 0.10.0
libtpu: 0.0.40
codegen_flags: <defaults>
</compile_context>

<pallas_src>
import jax
import jax.numpy as jnp
from jax.experimental import pallas as pl
from jax.experimental.pallas import tpu as pltpu


def _gate_select_kernel(x1_ref, x2_ref, g_ref, o_ref):
    # x1_ref/x2_ref/o_ref: VMEM (tile_rows, lane); g_ref: VMEM (1, lane).
    g = g_ref[...]                                   # same dtype as x
    o_ref[...] = x1_ref[...] * g + x2_ref[...] * (1 - g)


def _choose_tile_rows(rows, lane, itemsize, target_bytes):
    """Largest row-tile that satisfies the (8,128) sublane rule and keeps one
    (tile_rows, lane) block near `target_bytes`."""
    if rows % 8 != 0:
        return rows                                  # must use the full extent
    cap = max(8, target_bytes // (lane * itemsize))
    if rows <= cap:
        return rows
    best = 8
    t = 8
    while t <= cap:
        if rows % t == 0:
            best = t
        t += 8
    return best


def gate_selection_forward(x_1, x_2, gate, *, tile_rows=None,
                           target_block_bytes=2 * 1024 * 1024):
    """out = x_1 * gate + x_2 * (1 - gate); gate broadcast over leading dims."""
    assert x_1.shape == x_2.shape, "x_1 / x_2 shape mismatch"
    assert x_1.dtype == x_2.dtype, "x_1 / x_2 dtype mismatch"
    orig_shape = x_1.shape
    D = orig_shape[-1]
    assert gate.shape == (D,)

    lead = 1
    for s in orig_shape[:-1]:
        lead *= s

    # Pick a lane-dense 2D layout.
    if D % 128 == 0:
        rows, lane = lead, D
        gate2d = gate.reshape(1, D)
    elif 128 % D == 0 and (lead * D) % 128 == 0:
        # Fold D into the 128-lane axis; replicate the gate across the lanes.
        rows, lane = (lead * D) // 128, 128
        gate2d = jnp.tile(gate, 128 // D).reshape(1, 128)
    else:
        rows, lane = lead, D                         # fallback: full-D lanes
        gate2d = gate.reshape(1, D)

    gate2d = gate2d.astype(x_1.dtype)
    x1f = x_1.reshape(rows, lane)
    x2f = x_2.reshape(rows, lane)

    itemsize = jnp.dtype(x_1.dtype).itemsize
    if tile_rows is None:
        tile_rows = _choose_tile_rows(rows, lane, itemsize, target_block_bytes)
    assert rows % tile_rows == 0, "tile_rows must divide the row count"
    assert tile_rows == rows or tile_rows % 8 == 0, (
        "tile_rows must be a multiple of 8 or the full row extent")

    grid = (rows // tile_rows,)
    out = pl.pallas_call(
        _gate_select_kernel,
        out_shape=jax.ShapeDtypeStruct((rows, lane), x_1.dtype),
        grid=grid,
        in_specs=[
            pl.BlockSpec((tile_rows, lane), lambda i: (i, 0)),
            pl.BlockSpec((tile_rows, lane), lambda i: (i, 0)),
            pl.BlockSpec((1, lane), lambda i: (0, 0)),   # gate: fetched once
        ],
        out_specs=pl.BlockSpec((tile_rows, lane), lambda i: (i, 0)),
        compiler_params=pltpu.CompilerParams(
            dimension_semantics=("parallel",),
            vmem_limit_bytes=48 * 1024 * 1024),
    )(x1f, x2f, gate2d)
    return out.reshape(orig_shape)


if __name__ == "__main__":
    # Small shapes consistent with the module: x_1, x_2 are (B, L, dim_model).
    B, L, D = 2, 8, 32                               # dim_model = 32
    key = jax.random.PRNGKey(0)
    k1, k2, kg = jax.random.split(key, 3)
    x_1 = jax.random.normal(k1, (B, L, D), dtype=jnp.float32)
    x_2 = jax.random.normal(k2, (B, L, D), dtype=jnp.float32)
    gate = jax.random.uniform(kg, (D,), dtype=jnp.float32)  # ~ torch.rand(dim_model)

    out = gate_selection_forward(x_1, x_2, gate)
    out = jax.block_until_ready(out)

    # Pure-JAX reference check.
    ref = x_1 * gate[None, None, :] + x_2 * (1.0 - gate)[None, None, :]
    assert out.shape == (B, L, D)
    assert jnp.allclose(out, ref, atol=1e-6, rtol=1e-6), "mismatch vs reference"

    print("KERNEL_OK")
</pallas_src>

<mosaic_0001>
module attributes {stable_mosaic.version = 11 : i64} {
  func.func @_gate_select_kernel(%arg0: i32, %arg1: memref<4x128xf32, #tpu.memory_space<vmem>>, %arg2: memref<4x128xf32, #tpu.memory_space<vmem>>, %arg3: memref<1x128xf32, #tpu.memory_space<vmem>>, %arg4: memref<4x128xf32, #tpu.memory_space<vmem>>) attributes {dimension_semantics = [#tpu.dimension_semantics<parallel>], iteration_bounds = array<i64: 1>, scalar_prefetch = 0 : i64, scratch_operands = 0 : i64, tpu.core_type = #tpu.core_type<tc>, window_params = [{transform_indices = @transform_0, window_bounds = array<i64: 4, 128>}, {transform_indices = @transform_1, window_bounds = array<i64: 4, 128>}, {pipeline_mode = #tpu.pipeline_mode<synchronous>, transform_indices = @transform_2, window_bounds = array<i64: 1, 128>}, {transform_indices = @transform_3, window_bounds = array<i64: 4, 128>}]} {
    %c0 = arith.constant 0 : index
    %c0_0 = arith.constant 0 : index
    %0 = vector.load %arg3[%c0, %c0_0] : memref<1x128xf32, #tpu.memory_space<vmem>>, vector<1x128xf32>
    %c0_1 = arith.constant 0 : index
    %c0_2 = arith.constant 0 : index
    %1 = vector.load %arg1[%c0_1, %c0_2] : memref<4x128xf32, #tpu.memory_space<vmem>>, vector<4x128xf32>
    %2 = vector.broadcast %0 : vector<1x128xf32> to vector<4x128xf32>
    %3 = arith.mulf %1, %2 : vector<4x128xf32>
    %c0_3 = arith.constant 0 : index
    %c0_4 = arith.constant 0 : index
    %4 = vector.load %arg2[%c0_3, %c0_4] : memref<4x128xf32, #tpu.memory_space<vmem>>, vector<4x128xf32>
    %cst = arith.constant 1.000000e+00 : f32
    %5 = vector.broadcast %cst : f32 to vector<1x128xf32>
    %6 = arith.subf %5, %0 : vector<1x128xf32>
    %7 = vector.broadcast %6 : vector<1x128xf32> to vector<4x128xf32>
    %8 = arith.mulf %4, %7 : vector<4x128xf32>
    %9 = arith.addf %3, %8 : vector<4x128xf32>
    %c0_5 = arith.constant 0 : index
    %c0_6 = arith.constant 0 : index
    %10 = vector.load %arg4[%c0_5, %c0_6] : memref<4x128xf32, #tpu.memory_space<vmem>>, vector<4x128xf32>
    tpu.vector_store %arg4[%c0_5, %c0_6], %9 {strides = array<i32>} : memref<4x128xf32, #tpu.memory_space<vmem>>, vector<4x128xf32>,
    return
  }
  func.func @transform_0(%arg0: i32) -> (i32, i32) {
    %c0_i32 = arith.constant 0 : i32
    %c0_i32_0 = arith.constant 0 : i32
    return %arg0, %c0_i32 : i32, i32
  }
  func.func @transform_1(%arg0: i32) -> (i32, i32) {
    %c0_i32 = arith.constant 0 : i32
    %c0_i32_0 = arith.constant 0 : i32
    return %arg0, %c0_i32 : i32, i32
  }
  func.func @transform_2(%arg0: i32) -> (i32, i32) {
    %c0_i32 = arith.constant 0 : i32
    %c0_i32_0 = arith.constant 0 : i32
    %c0_i32_1 = arith.constant 0 : i32
    return %c0_i32, %c0_i32_0 : i32, i32
  }
  func.func @transform_3(%arg0: i32) -> (i32, i32) {
    %c0_i32 = arith.constant 0 : i32
    %c0_i32_0 = arith.constant 0 : i32
    return %arg0, %c0_i32 : i32, i32
  }
}

</mosaic_0001>

<llo_original>
// kernel: tpu_custom_call.1
$region0: #{tpu_custom_call.1}
  #allocation0 [shape = 'u32[]', space=smem, size = 0x4, offset = 0x4, fixed_abs, tag = 'smem constant byte address 0x4 - core index']
  #allocation1 [shape = 'u32[72,128]{1,0:T(1,128)}', space=vmem, size = 0x9000, scoped, tag = 'internal scratch']
  %s0 = inlined_call_operand.hbm [shape: f32[4,128], index: 0, kind: input, shape index: {}]
  %s1 = inlined_call_operand.hbm [shape: f32[4,128], index: 1, kind: input, shape index: {}]
  %s2 = inlined_call_operand.vmem [shape: f32[1,128], index: 2, kind: input, shape index: {}]
  %s3 = inlined_call_operand.hbm [shape: f32[4,128], index: 3, kind: output, shape index: {}]
  %s4 = sld [smem:[#allocation0]]
  $region30: #{tpu_custom_call.1} parent=0
    _
  %s6 = ssub.s32 1, %s4
  %s7 = scalar_select 0, %s6, %s4
  $region1: #{tpu_custom_call.1} parent=0
    #allocation2 [shape = 'u8[2048]{0}', space=vmem, size = 0x800, scoped, tag = 'input window, operand 0, single buffered']
    #allocation3 [shape = 's32[1]{0}', space=sflag, size = 0x4, scoped, tag = 'scoped memory for tpu_custom_call.1']
    #allocation4 [shape = 's32[1]{0}', space=sflag, size = 0x4, scoped, tag = 'scoped memory for tpu_custom_call.1']
    #allocation5 [shape = 'u8[2048]{0}', space=vmem, size = 0x800, scoped, tag = 'input window, operand 1, single buffered']
    #allocation6 [shape = 's32[1]{0}', space=sflag, size = 0x4, scoped, tag = 'scoped memory for tpu_custom_call.1']
    #allocation7 [shape = 'u8[2048]{0}', space=vmem, size = 0x800, scoped, tag = 'output window, operand 0, single buffered']
    %8 = vsyncpa [#allocation3], 0
    %9 = vsyncpa [#allocation6], 0
    %10 = vsyncpa [#allocation4], 0
    // Predicated region
    $region2: #{tpu_custom_call.1} parent=1 // pred_check
      _
    $region3: #{tpu_custom_call.1} parent=1 // pred_check_branch
      %12 = sbr.rel (0) target = $region5
    $region4: #{tpu_custom_call.1} parent=1 // pred_region
      %14 = vsyncadd [#allocation3], 0
      %s16 = sshll.u32 %s0, 4
      %s17 = int_to_ptr.hbm [resolvable:$true] %s16
      %s18 = sshll.u32 [#allocation2], 4
      %s19 = int_to_ptr.vmem [resolvable:$true] %s18
      %21 = dma.hbm_to_vmem [thread:$0]  %s17, 64, %s19, [#allocation3]
    $region5: #{tpu_custom_call.1} parent=1 // pred_fallthru
      _
    // Predicated region
    $region6: #{tpu_custom_call.1} parent=1 // pred_check
      _
    $region7: #{tpu_custom_call.1} parent=1 // pred_check_branch
      %23 = sbr.rel (0) target = $region9
    $region8: #{tpu_custom_call.1} parent=1 // pred_region
      %25 = vsyncadd [#allocation6], 0
      %s27 = sshll.u32 %s1, 4
      %s28 = int_to_ptr.hbm [resolvable:$true] %s27
      %s29 = sshll.u32 [#allocation5], 4
      %s30 = int_to_ptr.vmem [resolvable:$true] %s29
      %32 = dma.hbm_to_vmem [thread:$0]  %s28, 64, %s30, [#allocation6]
    $region9: #{tpu_custom_call.1} parent=1 // pred_fallthru
      _
    // Predicated region
    $region10: #{tpu_custom_call.1} parent=1 // pred_check
      _
    $region11: #{tpu_custom_call.1} parent=1 // pred_check_branch
      %34 = sbr.rel (0) target = $region13
    $region12: #{tpu_custom_call.1} parent=1 // pred_region
      _
    $region13: #{tpu_custom_call.1} parent=1 // pred_fallthru
      _
    // Predicated region
    $region14: #{tpu_custom_call.1} parent=1 // pred_check
      _
    $region15: #{tpu_custom_call.1} parent=1 // pred_check_branch
      %36 = sbr.rel (0) target = $region17
    $region16: #{tpu_custom_call.1} parent=1 // pred_region
      %38 = dma.done [#allocation3], 64
    $region17: #{tpu_custom_call.1} parent=1 // pred_fallthru
      _
    // Predicated region
    $region18: #{tpu_custom_call.1} parent=1 // pred_check
      _
    $region19: #{tpu_custom_call.1} parent=1 // pred_check_branch
      %40 = sbr.rel (0) target = $region21
    $region20: #{tpu_custom_call.1} parent=1 // pred_region
      %42 = dma.done [#allocation6], 64
    $region21: #{tpu_custom_call.1} parent=1 // pred_fallthru
      _
    %v43 = vld [vmem:[%s2] sm:$0x1]
    %v44 = vld [vmem:[#allocation2] sm:$0xf]
    %v46 = vperm.slane %v43, 0
    %v48 = vmul.f32 %v44, %v46
    %v49 = vld [vmem:[#allocation5] sm:$0xf]
    %v50 = vsub.f32 1.0, %v43
    %v52 = vperm.slane %v50, 0
    %v54 = vmul.f32 %v49, %v52
    %v55 = vadd.f32 %v48, %v54
    %56 = vst [vmem:[#allocation7] sm:$0xf] %v55
    // Predicated region
    $region22: #{tpu_custom_call.1} parent=1 // pred_check
      _
    $region23: #{tpu_custom_call.1} parent=1 // pred_check_branch
      %58 = sbr.rel (0) target = $region25
    $region24: #{tpu_custom_call.1} parent=1 // pred_region
      %60 = vsyncadd [#allocation4], 0
      %s62 = sshll.u32 [#allocation7], 4
      %s63 = int_to_ptr.vmem [resolvable:$true] %s62
      %s64 = sshll.u32 %s3, 4
      %s65 = int_to_ptr.hbm [resolvable:$true] %s64
      %67 = dma.vmem_to_hbm [thread:$0]  %s63, 64, %s65, [#allocation4]
    $region25: #{tpu_custom_call.1} parent=1 // pred_fallthru
      _
    // Predicated region
    $region26: #{tpu_custom_call.1} parent=1 // pred_check
      _
    $region27: #{tpu_custom_call.1} parent=1 // pred_check_branch
      %69 = sbr.rel (0) target = $region29
    $region28: #{tpu_custom_call.1} parent=1 // pred_region
      %71 = dma.done [#allocation4], 64
    $region29: #{tpu_custom_call.1} parent=1 // pred_fallthru
      _
    %72 = vsyncpa [#allocation3], 1
    %73 = vsyncpa [#allocation6], 1
    %74 = vsyncpa [#allocation4], 1

</llo_original>
